<compile_context>
chip_gen: v6e
topology: v6e:2x2x1
jax: 0.10.0
libtpu: 0.0.40
codegen_flags: <defaults>
</compile_context>

<pallas_src>
import jax
import jax.numpy as jnp
from jax.experimental import pallas as pl
from jax.experimental.pallas import tpu as pltpu


# ----------------------------------------------------------------------------
# Kernels
# ----------------------------------------------------------------------------
def _mlp_tile(x, w1_ref, b1_ref, w2_ref, b2_ref, out_dtype):
    """Per-frame 2-layer MLP on a (TN, F) tile. bf16 MXU inputs, f32 accum."""
    h = jnp.dot(x.astype(jnp.bfloat16), w1_ref[...],
                preferred_element_type=jnp.float32)          # [TN, H]
    h = jnp.maximum(h + b1_ref[...], 0.0)
    y = jnp.dot(h.astype(jnp.bfloat16), w2_ref[...],
                preferred_element_type=jnp.float32)          # [TN, F]
    return (y + b2_ref[...]).astype(out_dtype)


def _enhance_stereo_kernel(x_ref, w1_ref, b1_ref, w2_ref, b2_ref, out_ref):
    # x_ref: (1, 2, TN, F)   out_ref: (1, TN, F)
    # stereo -> mono downmix == torch .mean(dim=1); the 0.5 scale is folded
    # into w1 by the wrapper, so only the channel sum remains here.
    mono = x_ref[0, 0] + x_ref[0, 1]                          # [TN, F]
    out_ref[0] = _mlp_tile(mono, w1_ref, b1_ref, w2_ref, b2_ref, out_ref.dtype)


def _enhance_mono_kernel(x_ref, w1_ref, b1_ref, w2_ref, b2_ref, out_ref):
    # x_ref / out_ref: (TN, F) — batch and frames flattened into one row axis.
    out_ref[...] = _mlp_tile(x_ref[...], w1_ref, b1_ref, w2_ref, b2_ref,
                             out_ref.dtype)


# ----------------------------------------------------------------------------
# Tiling heuristics
# ----------------------------------------------------------------------------
def _pick_frame_tile(rows, target, min_tiles=1):
    """Pick a row-tile for a `rows`-long axis.

    * Aims for `target` rows per tile (clamped to >= 64) so grid-step overhead
      and DMA setup are amortized; tiles are a multiple of 8 (sublane aligned)
      or the full extent, so the (8, 128) rule is always satisfied.
    * With `min_tiles > 1`, shrinks the tile so at least that many grid steps
      exist (keeps both v7x TensorCores busy for single-utterance inference).
    * Callers use a cdiv grid, so the tile does NOT have to divide `rows`;
      the final partial tile is masked by Pallas. This also bounds the block
      size (<= target rows), so VMEM use stays small even for awkward sizes.
    """
    target = max(64, (int(target) // 8) * 8)
    tn = rows if rows <= target else target
    if min_tiles > 1 and rows > 8:
        want = -(-rows // min_tiles)              # cdiv(rows, min_tiles)
        want = ((want + 7) // 8) * 8              # round up to a multiple of 8
        tn = min(tn, max(8, want))
    return tn


# ----------------------------------------------------------------------------
# Wrapper
# ----------------------------------------------------------------------------
def monaural_speech_enhancement(noisy, w1, b1, w2, b2, *, frame_size,
                                tile_frames=512, out_dtype=None):
    """noisy: [B, 2, T] stereo or [B, T] mono (float32 or bfloat16)."""
    F = frame_size
    H = w1.shape[1]
    assert w1.shape[0] == F and w2.shape == (H, F)
    out_dtype = jnp.dtype(noisy.dtype if out_dtype is None else out_dtype)

    stereo = (noisy.ndim == 3 and noisy.shape[1] == 2)
    if stereo:
        B, _, T = noisy.shape
    else:
        B, T = noisy.shape
    assert T % F == 0, "T must be a multiple of the frame size"
    frames = T // F
    rows_total = B * frames

    # bf16 weights for the MXU; biases stay f32 (bias + ReLU done in f32).
    # Stereo: fold the .mean(dim=1) 0.5 scale into W1 (one-time, 64 KiB).
    w1_eff = (w1 * 0.5) if stereo else w1
    w1_bf = w1_eff.astype(jnp.bfloat16)
    w2_bf = w2.astype(jnp.bfloat16)
    b1_2d = b1.reshape(1, H).astype(jnp.float32)
    b2_2d = b2.reshape(1, F).astype(jnp.float32)

    # Constant index_maps -> weights/biases are DMA'd once and stay resident.
    const = lambda *_: (0, 0)
    weight_specs = [
        pl.BlockSpec((F, H), const),
        pl.BlockSpec((1, H), const),
        pl.BlockSpec((H, F), const),
        pl.BlockSpec((1, F), const),
    ]

    itemsize_in = jnp.dtype(noisy.dtype).itemsize
    cost = pl.CostEstimate(
        flops=4 * rows_total * F * H,             # two (TN,F)@(F,H)-class matmuls
        transcendentals=0,
        bytes_accessed=(noisy.size * itemsize_in
                        + rows_total * F * out_dtype.itemsize
                        + 2 * (w1_bf.size + w2_bf.size)
                        + 4 * (H + F)),
    )

    if stereo:
        # Free reshape (split of trailing dim) — no transpose, no extra HBM copy.
        # Block (1, 2, TN, F): channel axis stays non-minor, last two dims are
        # (TN, 128) lane/sublane dense.
        TN = _pick_frame_tile(frames, tile_frames,
                              min_tiles=2 if B == 1 else 1)
        n_tiles = pl.cdiv(frames, TN)
        xf = noisy.reshape(B, 2, frames, F)
        out = pl.pallas_call(
            _enhance_stereo_kernel,
            out_shape=jax.ShapeDtypeStruct((B, frames, F), out_dtype),
            grid=(B, n_tiles),
            in_specs=[pl.BlockSpec((1, 2, TN, F), lambda b, j: (b, 0, j, 0))]
                     + weight_specs,
            out_specs=pl.BlockSpec((1, TN, F), lambda b, j: (b, j, 0)),
            compiler_params=pltpu.CompilerParams(
                dimension_semantics=("parallel", "parallel")),
            cost_estimate=cost,
        )(xf, w1_bf, b1_2d, w2_bf, b2_2d)
    else:
        # Mono: flatten batch x frames into one row axis -> a single 1-D grid
        # of large tiles (fewer, bigger grid steps for short utterances).
        TN = _pick_frame_tile(rows_total, tile_frames, min_tiles=2)
        n_tiles = pl.cdiv(rows_total, TN)
        xf = noisy.reshape(rows_total, F)
        out = pl.pallas_call(
            _enhance_mono_kernel,
            out_shape=jax.ShapeDtypeStruct((rows_total, F), out_dtype),
            grid=(n_tiles,),
            in_specs=[pl.BlockSpec((TN, F), lambda i: (i, 0))] + weight_specs,
            out_specs=pl.BlockSpec((TN, F), lambda i: (i, 0)),
            compiler_params=pltpu.CompilerParams(
                dimension_semantics=("parallel",)),
            cost_estimate=cost,
        )(xf, w1_bf, b1_2d, w2_bf, b2_2d)

    return out.reshape(B, T)


# ----------------------------------------------------------------------------
# Plain-JAX reference (f32)
# ----------------------------------------------------------------------------
def reference_forward(noisy, w1, b1, w2, b2, *, frame_size):
    if noisy.ndim == 3 and noisy.shape[1] == 2:
        mono = noisy.mean(axis=1)
    else:
        mono = noisy
    B, T = mono.shape
    F = frame_size
    frames = mono.reshape(B * (T // F), F)
    h = jnp.maximum(frames @ w1 + b1, 0.0)
    y = h @ w2 + b2
    return y.reshape(B, T)


if __name__ == "__main__":
    B, T = 2, 2048         # batch, time samples  (frames per batch = 16)
    F, H = 128, 128        # frame size, hidden width

    key = jax.random.PRNGKey(0)
    k_x, k_w1, k_b1, k_w2, k_b2 = jax.random.split(key, 5)

    # stereo noisy utterance: [B, 2, T]
    noisy = jax.random.normal(k_x, (B, 2, T), dtype=jnp.float32)

    # deterministic synthetic model parameters
    w1 = jax.random.normal(k_w1, (F, H), dtype=jnp.float32) * 0.05
    b1 = jax.random.normal(k_b1, (H,), dtype=jnp.float32) * 0.01
    w2 = jax.random.normal(k_w2, (H, F), dtype=jnp.float32) * 0.05
    b2 = jax.random.normal(k_b2, (F,), dtype=jnp.float32) * 0.01

    # --- stereo path (downmix folded into W1, 2-D grid) -----------------
    out_s = monaural_speech_enhancement(noisy, w1, b1, w2, b2, frame_size=F)
    out_s = jax.block_until_ready(out_s)
    ref_s = reference_forward(noisy, w1, b1, w2, b2, frame_size=F)
    assert out_s.shape == (B, T)
    # bf16 matmul inputs, f32 accumulation -> relaxed tolerance vs f32 ref
    assert jnp.allclose(out_s, ref_s, atol=3e-2, rtol=3e-2), "stereo mismatch"

    # --- mono path (flattened batch*frames, 1-D grid) --------------------
    mono_in = noisy.mean(axis=1)
    out_m = monaural_speech_enhancement(mono_in, w1, b1, w2, b2, frame_size=F)
    out_m = jax.block_until_ready(out_m)
    ref_m = reference_forward(mono_in, w1, b1, w2, b2, frame_size=F)
    assert jnp.allclose(out_m, ref_m, atol=3e-2, rtol=3e-2), "mono mismatch"

    # --- ragged mono case: B=1, 72 frames -> cdiv grid with a partial tile
    noisy_r = jax.random.normal(k_x, (1, 72 * F), dtype=jnp.float32)
    out_r = monaural_speech_enhancement(noisy_r, w1, b1, w2, b2, frame_size=F)
    out_r = jax.block_until_ready(out_r)
    ref_r = reference_forward(noisy_r, w1, b1, w2, b2, frame_size=F)
    assert jnp.allclose(out_r, ref_r, atol=3e-2, rtol=3e-2), "ragged mismatch"

    # --- bf16 I/O path (no wrapper casts; halves HBM bytes) --------------
    noisy_bf = noisy.astype(jnp.bfloat16)
    out_b = monaural_speech_enhancement(noisy_bf, w1, b1, w2, b2, frame_size=F)
    out_b = jax.block_until_ready(out_b)
    assert out_b.dtype == jnp.bfloat16
    ref_b = reference_forward(noisy_bf.astype(jnp.float32), w1, b1, w2, b2,
                              frame_size=F)
    assert jnp.allclose(out_b.astype(jnp.float32), ref_b,
                        atol=6e-2, rtol=6e-2), "bf16 mismatch"

    # TODO(synk): `step()` (loss_func against clean_utterance) is training glue,
    # not part of the forward hot path; omitted.
    print("KERNEL_OK")
</pallas_src>

<mosaic_0001>
module attributes {stable_mosaic.version = 11 : i64} {
  func.func @_enhance_stereo_kernel(%arg0: i32, %arg1: i32, %arg2: memref<1x2x16x128xf32, #tpu.memory_space<vmem>>, %arg3: memref<128x128xbf16, #tpu.memory_space<vmem>>, %arg4: memref<1x128xf32, #tpu.memory_space<vmem>>, %arg5: memref<128x128xbf16, #tpu.memory_space<vmem>>, %arg6: memref<1x128xf32, #tpu.memory_space<vmem>>, %arg7: memref<1x16x128xf32, #tpu.memory_space<vmem>>) attributes {dimension_semantics = [#tpu.dimension_semantics<parallel>, #tpu.dimension_semantics<parallel>], iteration_bounds = array<i64: 2, 1>, scalar_prefetch = 0 : i64, scratch_operands = 0 : i64, tpu.core_type = #tpu.core_type<tc>, window_params = [{transform_indices = @transform_0, window_bounds = array<i64: 1, 2, 16, 128>}, {pipeline_mode = #tpu.pipeline_mode<synchronous>, transform_indices = @transform_1, window_bounds = array<i64: 128, 128>}, {pipeline_mode = #tpu.pipeline_mode<synchronous>, transform_indices = @transform_2, window_bounds = array<i64: 1, 128>}, {pipeline_mode = #tpu.pipeline_mode<synchronous>, transform_indices = @transform_3, window_bounds = array<i64: 128, 128>}, {pipeline_mode = #tpu.pipeline_mode<synchronous>, transform_indices = @transform_4, window_bounds = array<i64: 1, 128>}, {transform_indices = @transform_5, window_bounds = array<i64: 1, 16, 128>}]} {
    %c0 = arith.constant 0 : index
    %c0_0 = arith.constant 0 : index
    %c0_1 = arith.constant 0 : index
    %c0_2 = arith.constant 0 : index
    %0 = vector.load %arg2[%c0, %c0_0, %c0_1, %c0_2] : memref<1x2x16x128xf32, #tpu.memory_space<vmem>>, vector<1x1x16x128xf32>
    %1 = vector.shape_cast %0 : vector<1x1x16x128xf32> to vector<16x128xf32>
    %c0_3 = arith.constant 0 : index
    %c1 = arith.constant 1 : index
    %c0_4 = arith.constant 0 : index
    %c0_5 = arith.constant 0 : index
    %2 = vector.load %arg2[%c0_3, %c1, %c0_4, %c0_5] : memref<1x2x16x128xf32, #tpu.memory_space<vmem>>, vector<1x1x16x128xf32>
    %3 = vector.shape_cast %2 : vector<1x1x16x128xf32> to vector<16x128xf32>
    %4 = arith.addf %1, %3 : vector<16x128xf32>
    %5 = arith.truncf %4 : vector<16x128xf32> to vector<16x128xbf16>
    %c0_6 = arith.constant 0 : index
    %c0_7 = arith.constant 0 : index
    %6 = vector.load %arg3[%c0_6, %c0_7] : memref<128x128xbf16, #tpu.memory_space<vmem>>, vector<128x128xbf16>
    %cst = arith.constant dense<0.000000e+00> : vector<16x128xf32>
    %7 = tpu.matmul %5, %6, %cst {dimension_numbers = #tpu.dot_dimension_numbers<[1], [0], [0], [1], [0, 0, 1, 1], [], []>} : vector<16x128xbf16>, vector<128x128xbf16>, vector<16x128xf32> -> vector<16x128xf32>
    %c0_8 = arith.constant 0 : index
    %c0_9 = arith.constant 0 : index
    %8 = vector.load %arg4[%c0_8, %c0_9] : memref<1x128xf32, #tpu.memory_space<vmem>>, vector<1x128xf32>
    %9 = vector.broadcast %8 : vector<1x128xf32> to vector<16x128xf32>
    %10 = arith.addf %7, %9 : vector<16x128xf32>
    %cst_10 = arith.constant 0.000000e+00 : f32
    %11 = vector.broadcast %cst_10 : f32 to vector<16x128xf32>
    %12 = arith.maximumf %10, %11 : vector<16x128xf32>
    %13 = arith.truncf %12 : vector<16x128xf32> to vector<16x128xbf16>
    %c0_11 = arith.constant 0 : index
    %c0_12 = arith.constant 0 : index
    %14 = vector.load %arg5[%c0_11, %c0_12] : memref<128x128xbf16, #tpu.memory_space<vmem>>, vector<128x128xbf16>
    %cst_13 = arith.constant dense<0.000000e+00> : vector<16x128xf32>
    %15 = tpu.matmul %13, %14, %cst_13 {dimension_numbers = #tpu.dot_dimension_numbers<[1], [0], [0], [1], [0, 0, 1, 1], [], []>} : vector<16x128xbf16>, vector<128x128xbf16>, vector<16x128xf32> -> vector<16x128xf32>
    %c0_14 = arith.constant 0 : index
    %c0_15 = arith.constant 0 : index
    %16 = vector.load %arg6[%c0_14, %c0_15] : memref<1x128xf32, #tpu.memory_space<vmem>>, vector<1x128xf32>
    %17 = vector.broadcast %16 : vector<1x128xf32> to vector<16x128xf32>
    %18 = arith.addf %15, %17 : vector<16x128xf32>
    %c0_16 = arith.constant 0 : index
    %c0_17 = arith.constant 0 : index
    %c0_18 = arith.constant 0 : index
    %19 = vector.load %arg7[%c0_16, %c0_17, %c0_18] : memref<1x16x128xf32, #tpu.memory_space<vmem>>, vector<1x16x128xf32>
    %20 = vector.shape_cast %19 : vector<1x16x128xf32> to vector<16x128xf32>
    %21 = vector.shape_cast %18 : vector<16x128xf32> to vector<1x16x128xf32>
    tpu.vector_store %arg7[%c0_16, %c0_17, %c0_18], %21 {strides = array<i32>} : memref<1x16x128xf32, #tpu.memory_space<vmem>>, vector<1x16x128xf32>,
    return
  }
  func.func @transform_0(%arg0: i32, %arg1: i32) -> (i32, i32, i32, i32) {
    %c0_i32 = arith.constant 0 : i32
    %c0_i32_0 = arith.constant 0 : i32
    %c0_i32_1 = arith.constant 0 : i32
    return %arg0, %c0_i32, %arg1, %c0_i32_0 : i32, i32, i32, i32
  }
  func.func @transform_1(%arg0: i32, %arg1: i32) -> (i32, i32) {
    %c0_i32 = arith.constant 0 : i32
    %c0_i32_0 = arith.constant 0 : i32
    %c0_i32_1 = arith.constant 0 : i32
    return %c0_i32, %c0_i32_0 : i32, i32
  }
  func.func @transform_2(%arg0: i32, %arg1: i32) -> (i32, i32) {
    %c0_i32 = arith.constant 0 : i32
    %c0_i32_0 = arith.constant 0 : i32
    %c0_i32_1 = arith.constant 0 : i32
    return %c0_i32, %c0_i32_0 : i32, i32
  }
  func.func @transform_3(%arg0: i32, %arg1: i32) -> (i32, i32) {
    %c0_i32 = arith.constant 0 : i32
    %c0_i32_0 = arith.constant 0 : i32
    %c0_i32_1 = arith.constant 0 : i32
    return %c0_i32, %c0_i32_0 : i32, i32
  }
  func.func @transform_4(%arg0: i32, %arg1: i32) -> (i32, i32) {
    %c0_i32 = arith.constant 0 : i32
    %c0_i32_0 = arith.constant 0 : i32
    %c0_i32_1 = arith.constant 0 : i32
    return %c0_i32, %c0_i32_0 : i32, i32
  }
  func.func @transform_5(%arg0: i32, %arg1: i32) -> (i32, i32, i32) {
    %c0_i32 = arith.constant 0 : i32
    %c0_i32_0 = arith.constant 0 : i32
    return %arg0, %arg1, %c0_i32 : i32, i32, i32
  }
}

</mosaic_0001>

<llo_original>
// kernel: tpu_custom_call.1
$region0: #{tpu_custom_call.1}
  #allocation0 [shape = 'u32[]', space=smem, size = 0x4, offset = 0x4, fixed_abs, tag = 'smem constant byte address 0x4 - core index']
  #allocation1 [shape = 'u32[144,128]{1,0:T(1,128)}', space=vmem, size = 0x12000, scoped, tag = 'internal scratch']
  %s0 = inlined_call_operand.hbm [shape: f32[2,2,16,128], index: 0, kind: input, shape index: {}]
  %s1 = inlined_call_operand.hbm [shape: bf16[128,128], index: 1, kind: input, shape index: {}]
  %s2 = inlined_call_operand.vmem [shape: f32[1,128], index: 2, kind: input, shape index: {}]
  %s3 = inlined_call_operand.hbm [shape: bf16[128,128], index: 3, kind: input, shape index: {}]
  %s4 = inlined_call_operand.vmem [shape: f32[1,128], index: 4, kind: input, shape index: {}]
  %s5 = inlined_call_operand.hbm [shape: f32[2,16,128], index: 5, kind: output, shape index: {}]
  %s6 = sld [smem:[#allocation0]]
  $region65: #{tpu_custom_call.1} parent=0
    _
  %s8 = ssub.s32 1, %s6
  %s9 = scalar_select 0, %s8, %s6
  $region1: #{tpu_custom_call.1} parent=0
    #allocation2 [shape = 'u8[32768]{0}', space=vmem, size = 0x8000, scoped, tag = 'input window, operand 0']
    #allocation3 [shape = 's32[2]{0}', space=sflag, size = 0x8, scoped, tag = 'scoped memory for tpu_custom_call.1']
    #allocation4 [shape = 's32[2]{0}', space=sflag, size = 0x8, scoped, tag = 'scoped memory for tpu_custom_call.1']
    #allocation5 [shape = 'u8[32768]{0}', space=vmem, size = 0x8000, scoped, tag = 'input window, operand 1, single buffered']
    #allocation6 [shape = 's32[1]{0}', space=sflag, size = 0x4, scoped, tag = 'scoped memory for tpu_custom_call.1']
    #allocation7 [shape = 'u8[32768]{0}', space=vmem, size = 0x8000, scoped, tag = 'input window, operand 3, single buffered']
    #allocation8 [shape = 'u8[16384]{0}', space=vmem, size = 0x4000, scoped, tag = 'output window, operand 0']
    %10 = vsyncpa [#allocation3], 0
    %s11 = scalar_lea.sflag [#allocation3], 1
    %12 = vsyncpa %s11, 0
    %13 = vsyncpa [#allocation6], 0
    %14 = vsyncpa [#allocation4], 0
    %s15 = scalar_lea.sflag [#allocation4], 1
    %16 = vsyncpa %s15, 0
    loop: start=0, step=1, limit=4
    $region2: #{tpu_custom_call.1} parent=1 // loop_pre_header
      _
    $region3: #{tpu_custom_call.1} parent=1 // loop_header
      %s18 = sphi 0, %s22
      %p19 = scmp.ge.s32.totalorder %s18, 4
      %s25 = sphi 0, %s37
      %s26 = sphi 0, %s33
      %s27 = sphi 0, %s25
      %s28 = sphi 0, %s26
      %s29 = sphi 0, %s27
      %s30 = sphi 0, %s28
      %s42 = sphi 0, %s44
      %s45 = sphi 0, %s42
      %s46 = sphi 0, %s45
      %s62 = sphi 0, %s46
      %s66 = sphi 0, %s66
      %s68 = sphi 0, %s66
      %s69 = sphi 0, %s68
      %s83 = sphi 0, %s69
      %s87 = sphi 0, %s87
      %s89 = sphi 0, %s87
      %s90 = sphi 0, %s89
      %s104 = sphi 0, %s90
      %s108 = sphi 0, %s108
      %s110 = sphi 0, %s108
      %s111 = sphi 0, %s110
      %s125 = sphi 0, %s111
      %s129 = sphi 0, %s129
      %s131 = sphi 0, %s129
      %s132 = sphi 0, %s131
      %s146 = sphi 0, %s132
      %s154 = sphi 0, %s156
      %s157 = sphi 0, %s154
      %s158 = sphi 0, %s157
      %s174 = sphi 0, %s158
    $region4: #{tpu_custom_call.1} parent=1 // loop_header_branch
      %21 = sbr.rel (%p19) target = $region8
    $region5: #{tpu_custom_call.1} parent=1 // loop_body
      %s23 = ssub.s32 %s18, 1
      %s24 = ssub.s32 %s18, 2
      %s31 = sadd.s32 1, %s26
      %p32 = scmp.ge.s32.totalorder %s31, 1
      %s33 = scalar_select %p32, 0, %s31
      %s34 = sadd.s32 1, %s25
      %s35 = scalar_select %p32, %s34, %s25
      %p36 = scmp.ge.s32.totalorder %s35, 2
      %s37 = scalar_select %p36, 0, %s35
      %s38 = ssub.s32 %s25, %s37
      %s39 = ssub.s32 %s26, %s33
      %s40 = sor.u32 %s38, %s39
      %p41 = scmp.eq.s32.totalorder %s40, 0
      %s43 = sadd.s32 %s42, 1
      %s44 = scalar_select %p41, %s42, %s43
      %p47 = pneg %p41
      %p48 = scmp.eq.s32.totalorder %s18, 1
      %p49 = por %p47, %p48
      %p50 = scmp.ne.s32.totalorder %s42, %s45
      %p51 = scmp.eq.s32.totalorder %s18, 0
      %p52 = por %p50, %p51
      %p53 = scmp.ne.s32.totalorder %s42, %s45
      %p54 = scmp.eq.s32.totalorder %s23, 1
      %p55 = por %p53, %p54
      %p56 = scmp.ne.s32.totalorder %s45, %s46
      %p57 = scmp.eq.s32.totalorder %s23, 0
      %p58 = por %p56, %p57
      %p59 = scmp.ne.s32.totalorder %s45, %s46
      %p60 = scmp.eq.s32.totalorder %s24, 1
      %p61 = por %p59, %p60
      %p63 = scmp.ne.s32.totalorder %s46, %s62
      %p64 = scmp.eq.s32.totalorder %s24, 0
      %p65 = por %p63, %p64
      %s67 = sadd.s32 %s66, 1
      %p70 = scmp.eq.s32.totalorder %s18, 1
      %p71 = scmp.ne.s32.totalorder %s66, %s68
      %p72 = scmp.eq.s32.totalorder %s18, 0
      %p73 = por %p71, %p72
      %p74 = scmp.ne.s32.totalorder %s66, %s68
      %p75 = scmp.eq.s32.totalorder %s23, 1
      %p76 = por %p74, %p75
      %p77 = scmp.ne.s32.totalorder %s68, %s69
      %p78 = scmp.eq.s32.totalorder %s23, 0
      %p79 = por %p77, %p78
      %p80 = scmp.ne.s32.totalorder %s68, %s69
      %p81 = scmp.eq.s32.totalorder %s24, 1
      %p82 = por %p80, %p81
      %p84 = scmp.ne.s32.totalorder %s69, %s83
      %p85 = scmp.eq.s32.totalorder %s24, 0
      %p86 = por %p84, %p85
      %s88 = sadd.s32 %s87, 1
      %p91 = scmp.eq.s32.totalorder %s18, 1
      %p92 = scmp.ne.s32.totalorder %s87, %s89
      %p93 = scmp.eq.s32.totalorder %s18, 0
      %p94 = por %p92, %p93
      %p95 = scmp.ne.s32.totalorder %s87, %s89
      %p96 = scmp.eq.s32.totalorder %s23, 1
      %p97 = por %p95, %p96
      %p98 = scmp.ne.s32.totalorder %s89, %s90
      %p99 = scmp.eq.s32.totalorder %s23, 0
      %p100 = por %p98, %p99
      %p101 = scmp.ne.s32.totalorder %s89, %s90
      %p102 = scmp.eq.s32.totalorder %s24, 1
      %p103 = por %p101, %p102
      %p105 = scmp.ne.s32.totalorder %s90, %s104
      %p106 = scmp.eq.s32.totalorder %s24, 0
      %p107 = por %p105, %p106
      %s109 = sadd.s32 %s108, 1
      %p112 = scmp.eq.s32.totalorder %s18, 1
      %p113 = scmp.ne.s32.totalorder %s108, %s110
      %p114 = scmp.eq.s32.totalorder %s18, 0
      %p115 = por %p113, %p114
      %p116 = scmp.ne.s32.totalorder %s108, %s110
      %p117 = scmp.eq.s32.totalorder %s23, 1
      %p118 = por %p116, %p117
      %p119 = scmp.ne.s32.totalorder %s110, %s111
      %p120 = scmp.eq.s32.totalorder %s23, 0
      %p121 = por %p119, %p120
      %p122 = scmp.ne.s32.totalorder %s110, %s111
      %p123 = scmp.eq.s32.totalorder %s24, 1
      %p124 = por %p122, %p123
      %p126 = scmp.ne.s32.totalorder %s111, %s125
      %p127 = scmp.eq.s32.totalorder %s24, 0
      %p128 = por %p126, %p127
      %s130 = sadd.s32 %s129, 1
      %p133 = scmp.eq.s32.totalorder %s18, 1
      %p134 = scmp.ne.s32.totalorder %s129, %s131
      %p135 = scmp.eq.s32.totalorder %s18, 0
      %p136 = por %p134, %p135
      %p137 = scmp.ne.s32.totalorder %s129, %s131
      %p138 = scmp.eq.s32.totalorder %s23, 1
      %p139 = por %p137, %p138
      %p140 = scmp.ne.s32.totalorder %s131, %s132
      %p141 = scmp.eq.s32.totalorder %s23, 0
      %p142 = por %p140, %p141
      %p143 = scmp.ne.s32.totalorder %s131, %s132
      %p144 = scmp.eq.s32.totalorder %s24, 1
      %p145 = por %p143, %p144
      %p147 = scmp.ne.s32.totalorder %s132, %s146
      %p148 = scmp.eq.s32.totalorder %s24, 0
      %p149 = por %p147, %p148
      %s150 = ssub.s32 %s25, %s37
      %s151 = ssub.s32 %s26, %s33
      %s152 = sor.u32 %s150, %s151
      %p153 = scmp.eq.s32.totalorder %s152, 0
      %s155 = sadd.s32 %s154, 1
      %s156 = scalar_select %p153, %s154, %s155
      %p159 = pneg %p153
      %p160 = scmp.eq.s32.totalorder %s18, 1
      %p161 = por %p159, %p160
      %p162 = scmp.ne.s32.totalorder %s154, %s157
      %p163 = scmp.eq.s32.totalorder %s18, 0
      %p164 = por %p162, %p163
      %p165 = scmp.ne.s32.totalorder %s154, %s157
      %p166 = scmp.eq.s32.totalorder %s23, 1
      %p167 = por %p165, %p166
      %p168 = scmp.ne.s32.totalorder %s157, %s158
      %p169 = scmp.eq.s32.totalorder %s23, 0
      %p170 = por %p168, %p169
      %p171 = scmp.ne.s32.totalorder %s157, %s158
      %p172 = scmp.eq.s32.totalorder %s24, 1
      %p173 = por %p171, %p172
      %p175 = scmp.ne.s32.totalorder %s158, %s174
      %p176 = scmp.eq.s32.totalorder %s24, 0
      %p177 = por %p175, %p176
      %p178 = scmp.le.s32.totalorder 1, %s18
      %p179 = scmp.lt.s32.totalorder %s18, 3
      %p180 = pnand %p178, %p179
      %p181 = pneg %p180
      // Predicated region
      $region9: #{tpu_custom_call.1} parent=5 // pred_check
        _
      $region10: #{tpu_custom_call.1} parent=5 // pred_check_branch
        %183 = sbr.rel (%p180) target = $region12
      $region11: #{tpu_custom_call.1} parent=5 // pred_region
        %s184 = ssub.s32 %s18, 1
        // Predicated region
        $region13: #{tpu_custom_call.1} parent=11 // pred_check
          %p185 = pneg %p79
        $region14: #{tpu_custom_call.1} parent=11 // pred_check_branch
          %187 = sbr.rel (%p185) target = $region16
        $region15: #{tpu_custom_call.1} parent=11 // pred_region
          %s189 = ssub.s32 1024, 1024
          %190 = vsyncadd [#allocation6], %s189
          %s191 = sshll.u32 [#allocation5], 4
          %s192 = int_to_ptr.vmem [resolvable:$true] %s191
          %197 = dma.hbm_to_vmem [thread:$0]  %s1, 1024, %s192, [#allocation6], 64, 64, 4
        $region16: #{tpu_custom_call.1} parent=11 // pred_fallthru
          _
        // Predicated region
        $region17: #{tpu_custom_call.1} parent=11 // pred_check
          %p198 = pneg %p100
        $region18: #{tpu_custom_call.1} parent=11 // pred_check_branch
          %200 = sbr.rel (%p198) target = $region20
        $region19: #{tpu_custom_call.1} parent=11 // pred_region
          _
        $region20: #{tpu_custom_call.1} parent=11 // pred_fallthru
          _
        // Predicated region
        $region21: #{tpu_custom_call.1} parent=11 // pred_check
          %p201 = pneg %p121
        $region22: #{tpu_custom_call.1} parent=11 // pred_check_branch
          %203 = sbr.rel (%p201) target = $region24
        $region23: #{tpu_custom_call.1} parent=11 // pred_region
          %s205 = ssub.s32 1024, 1024
          %206 = vsyncadd [#allocation6], %s205
          %s207 = sshll.u32 [#allocation7], 4
          %s208 = int_to_ptr.vmem [resolvable:$true] %s207
          %213 = dma.hbm_to_vmem [thread:$0]  %s3, 1024, %s208, [#allocation6], 64, 64, 4
        $region24: #{tpu_custom_call.1} parent=11 // pred_fallthru
          _
        // Predicated region
        $region25: #{tpu_custom_call.1} parent=11 // pred_check
          %p214 = pneg %p142
        $region26: #{tpu_custom_call.1} parent=11 // pred_check_branch
          %216 = sbr.rel (%p214) target = $region28
        $region27: #{tpu_custom_call.1} parent=11 // pred_region
          _
        $region28: #{tpu_custom_call.1} parent=11 // pred_fallthru
          _
      $region12: #{tpu_custom_call.1} parent=5 // pred_fallthru
        _
      %p217 = scmp.lt.s32.totalorder %s18, 2
      // Predicated region
      $region29: #{tpu_custom_call.1} parent=5 // pred_check
        %p218 = pneg %p217
      $region30: #{tpu_custom_call.1} parent=5 // pred_check_branch
        %220 = sbr.rel (%p218) target = $region32
      $region31: #{tpu_custom_call.1} parent=5 // pred_region
        // Predicated region
        $region33: #{tpu_custom_call.1} parent=31 // pred_check
          %p221 = pneg %p52
        $region34: #{tpu_custom_call.1} parent=31 // pred_check_branch
          %223 = sbr.rel (%p221) target = $region36
        $region35: #{tpu_custom_call.1} parent=31 // pred_region
          %s224 = sand.u32 %s42, 1
          %s225 = scalar_lea.sflag [#allocation3], %s224
          %s226 = sand.u32 %s42, 1
          %s227 = smul.addr %s226, 32
          %s228 = scalar_lea.vmem [#allocation2], %s227
          %s229 = smul.u32 2, %s26
          %s231 = ssub.s32 512, 512
          %232 = vsyncadd %s225, %s231
          %s233 = smul.addr %s25, 4
          %s234 = sadd.s32 %s229, %s233
          %s235 = smul.addr %s234, 128
          %s236 = scalar_lea.hbm %s0, %s235
          %s237 = sshll.u32 %s228, 4
          %s238 = int_to_ptr.vmem [resolvable:$true] %s237
          %243 = dma.hbm_to_vmem [thread:$0]  %s236, 512, %s238, %s225, 128, 128, 8
        $region36: #{tpu_custom_call.1} parent=31 // pred_fallthru
          _
      $region32: #{tpu_custom_call.1} parent=5 // pred_fallthru
        _
      %p244 = scmp.le.s32.totalorder 1, %s18
      %p245 = scmp.lt.s32.totalorder %s18, 3
      %p246 = pnand %p244, %p245
      %p247 = pneg %p246
      // Predicated region
      $region37: #{tpu_custom_call.1} parent=5 // pred_check
        _
      $region38: #{tpu_custom_call.1} parent=5 // pred_check_branch
        %249 = sbr.rel (%p246) target = $region40
      $region39: #{tpu_custom_call.1} parent=5 // pred_region
        %s250 = ssub.s32 %s18, 1
        %s251 = sand.u32 %s45, 1
        %s252 = scalar_lea.sflag [#allocation3], %s251
        %s253 = sand.u32 %s45, 1
        %s254 = smul.addr %s253, 32
        %s255 = scalar_lea.vmem [#allocation2], %s254
        // Predicated region
        $region41: #{tpu_custom_call.1} parent=39 // pred_check
          %p256 = pneg %p58
        $region42: #{tpu_custom_call.1} parent=39 // pred_check_branch
          %258 = sbr.rel (%p256) target = $region44
        $region43: #{tpu_custom_call.1} parent=39 // pred_region
          %259 = dma.done %s252, 512
        $region44: #{tpu_custom_call.1} parent=39 // pred_fallthru
          _
        // Predicated region
        $region45: #{tpu_custom_call.1} parent=39 // pred_check
          %p260 = pneg %p79
        $region46: #{tpu_custom_call.1} parent=39 // pred_check_branch
          %262 = sbr.rel (%p260) target = $region48
        $region47: #{tpu_custom_call.1} parent=39 // pred_region
          %263 = dma.done [#allocation6], 1024
        $region48: #{tpu_custom_call.1} parent=39 // pred_fallthru
          _
        // Predicated region
        $region49: #{tpu_custom_call.1} parent=39 // pred_check
          %p264 = pneg %p121
        $region50: #{tpu_custom_call.1} parent=39 // pred_check_branch
          %266 = sbr.rel (%p264) target = $region52
        $region51: #{tpu_custom_call.1} parent=39 // pred_region
          %267 = dma.done [#allocation6], 1024
        $region52: #{tpu_custom_call.1} parent=39 // pred_fallthru
          _
        %s268 = sand.u32 %s45, 1
        %s269 = scalar_lea.sflag [#allocation3], %s268
        %s270 = sand.u32 %s45, 1
        %s271 = smul.addr %s270, 32
        %s272 = scalar_lea.vmem [#allocation2], %s271
        %p273 = pneg %p58
        %p274 = pneg %p55
        %p275 = pneg %p79
        %p276 = pneg %p76
        %p277 = pneg %p100
        %p278 = pneg %p97
        %p279 = pneg %p121
        %p280 = pneg %p118
        %p281 = pneg %p142
        %p282 = pneg %p139
        %p283 = pneg %p170
        %p284 = pneg %p167
        %s285 = sand.u32 %s157, 1
        %s286 = scalar_lea.sflag [#allocation4], %s285
        %s287 = sand.u32 %s157, 1
        %s288 = smul.addr %s287, 16
        %s289 = scalar_lea.vmem [#allocation8], %s288
        %s290 = smul.u32 2, %s28
        %s291 = smul.u32 2, %s28
        %v293 = vld [vmem:[%s255] sm:$0xff]
        %v294 = vld [vmem:[%s255 + $0x8] sm:$0xff]
        %s295 = scalar_lea.vmem %s255, 16 [#allocation2]
        %v296 = vld [vmem:[%s295] sm:$0xff]
        %v297 = vld [vmem:[%s295 + $0x8] sm:$0xff]
        %v298 = vadd.f32 %v293, %v296
        %v299 = vadd.f32 %v294, %v297
        %v300 = vpack.c.bf16 %v299, %v298
        %v301 = vld [vmem:[#allocation5] sm:$0xf]
        %v302 = vld [vmem:[#allocation5 + $0x4] sm:$0xf]
        %v303 = vld [vmem:[#allocation5 + $0x8] sm:$0xf]
        %v304 = vld [vmem:[#allocation5 + $0xc] sm:$0xf]
        %v305 = vld [vmem:[#allocation5 + $0x10] sm:$0xf]
        %v306 = vld [vmem:[#allocation5 + $0x14] sm:$0xf]
        %v307 = vld [vmem:[#allocation5 + $0x18] sm:$0xf]
        %v308 = vld [vmem:[#allocation5 + $0x1c] sm:$0xf]
        %v309 = vld [vmem:[#allocation5 + $0x20] sm:$0xf]
        %v310 = vld [vmem:[#allocation5 + $0x24] sm:$0xf]
        %v311 = vld [vmem:[#allocation5 + $0x28] sm:$0xf]
        %v312 = vld [vmem:[#allocation5 + $0x2c] sm:$0xf]
        %v313 = vld [vmem:[#allocation5 + $0x30] sm:$0xf]
        %v314 = vld [vmem:[#allocation5 + $0x34] sm:$0xf]
        %v315 = vld [vmem:[#allocation5 + $0x38] sm:$0xf]
        %v316 = vld [vmem:[#allocation5 + $0x3c] sm:$0xf]
        %v317 = vld [vmem:[%s2] sm:$0x1]
        %v319 = vlaneseq
        %v320 = vshrl.u32 %v319, 7
        %v321 = vsub.s32 0, %v320
        %v322 = vrot.slane %v317, %v321
        %v340 = vunpack.c.l.b16 %v301
        %v341 = vunpack.c.l.b16 %v302
        %v342 = vunpack.c.l.b16 %v303
        %v343 = vunpack.c.l.b16 %v304
        %v344 = vunpack.c.l.b16 %v305
        %v345 = vunpack.c.l.b16 %v306
        %v346 = vunpack.c.l.b16 %v307
        %v347 = vunpack.c.l.b16 %v308
        %v348 = vunpack.c.l.b16 %v309
        %v349 = vunpack.c.l.b16 %v310
        %v350 = vunpack.c.l.b16 %v311
        %v351 = vunpack.c.l.b16 %v312
        %v352 = vunpack.c.l.b16 %v313
        %v353 = vunpack.c.l.b16 %v314
        %v354 = vunpack.c.l.b16 %v315
        %v355 = vunpack.c.l.b16 %v316
        %v356 = vpack.c.b16 %v341, %v340
        %v357 = vpack.c.b16 %v343, %v342
        %v358 = vpack.c.b16 %v345, %v344
        %v359 = vpack.c.b16 %v347, %v346
        %v360 = vpack.c.b16 %v349, %v348
        %v361 = vpack.c.b16 %v351, %v350
        %v362 = vpack.c.b16 %v353, %v352
        %v363 = vpack.c.b16 %v355, %v354
        %372 = vmatprep.subr.bf16.mxu0 0
        %373 = vmatpush1.bf16.msra.mxu0 %v363
        %374 = vmatprep.subr.bf16.mxu0 0
        %375 = vmatpush1.bf16.msra.mxu0 %v362
        %376 = vmatprep.subr.bf16.mxu0 0
        %377 = vmatpush1.bf16.msra.mxu0 %v361
        %378 = vmatprep.subr.bf16.mxu0 0
        %379 = vmatpush1.bf16.msra.mxu0 %v360
        %380 = vmatprep.subr.bf16.mxu0 0
        %381 = vmatpush1.bf16.msra.mxu0 %v359
        %382 = vmatprep.subr.bf16.mxu0 0
        %383 = vmatpush1.bf16.msra.mxu0 %v358
        %384 = vmatprep.subr.bf16.mxu0 0
        %385 = vmatpush1.bf16.msra.mxu0 %v357
        %386 = vmatprep.subr.bf16.mxu0 0
        %387 = vmatpush1.bf16.msra.mxu0 %v356
        %388 = vmatprep.subr.bf16.mxu0 0
        %389 = vmatpush2.bf16.msra.mxu0 0
        %390 = vmatprep.subr.bf16.mxu0 0
        %391 = vmatpush2.bf16.msra.mxu0 0
        %392 = vmatprep.subr.bf16.mxu0 0
        %393 = vmatpush2.bf16.msra.mxu0 0
        %394 = vmatprep.subr.bf16.mxu0 0
        %395 = vmatpush2.bf16.msra.mxu0 0
        %396 = vmatprep.subr.bf16.mxu0 0
        %397 = vmatpush2.bf16.msra.mxu0 0
        %398 = vmatprep.subr.bf16.mxu0 0
        %399 = vmatpush2.bf16.msra.mxu0 0
        %400 = vmatprep.subr.bf16.mxu0 0
        %401 = vmatpush2.bf16.msra.mxu0 0
        %402 = vmatprep.subr.bf16.mxu0 0
        %403 = vmatpush2.bf16.msra.mxu0 0
        %404 = vmatprep.mubr.bf16.mxu0 0
        %405 = vmatmul.mubr.bf16.gmra.mxu0 %v300
        %v406 = vpop.f32.mrf.mxu0
        %v407 = vadd.f32 %v322, %v406
        %v408 = vpop.f32.mrf.mxu0
        %v409 = vpop.f32.mrf.mxu0
        %v410 = vadd.f32 %v322, %v409
        %v411 = vpop.f32.mrf.mxu0
        %412 = vdwg.mxu0
        %v413 = vmax.f32 %v407, 0.0
        %v414 = vmax.f32 %v410, 0.0
        %v415 = vpack.c.bf16 %v414, %v413
        %v416 = vld [vmem:[#allocation7] sm:$0xf]
        %v417 = vld [vmem:[#allocation7 + $0x4] sm:$0xf]
        %v418 = vld [vmem:[#allocation7 + $0x8] sm:$0xf]
        %v419 = vld [vmem:[#allocation7 + $0xc] sm:$0xf]
        %v420 = vld [vmem:[#allocation7 + $0x10] sm:$0xf]
        %v421 = vld [vmem:[#allocation7 + $0x14] sm:$0xf]
        %v422 = vld [vmem:[#allocation7 + $0x18] sm:$0xf]
        %v423 = vld [vmem:[#allocation7 + $0x1c] sm:$0xf]
        %v424 = vld [vmem:[#allocation7 + $0x20] sm:$0xf]
        %v425 = vld [vmem:[#allocation7 + $0x24] sm:$0xf]
        %v426 = vld [vmem:[#allocation7 + $0x28] sm:$0xf]
        %v427 = vld [vmem:[#allocation7 + $0x2c] sm:$0xf]
        %v428 = vld [vmem:[#allocation7 + $0x30] sm:$0xf]
        %v429 = vld [vmem:[#allocation7 + $0x34] sm:$0xf]
        %v430 = vld [vmem:[#allocation7 + $0x38] sm:$0xf]
        %v431 = vld [vmem:[#allocation7 + $0x3c] sm:$0xf]
        %v432 = vld [vmem:[%s4] sm:$0x1]
        %v434 = vlaneseq
        %v435 = vshrl.u32 %v434, 7
        %v436 = vsub.s32 0, %v435
        %v437 = vrot.slane %v432, %v436
        %v455 = vunpack.c.l.b16 %v416
        %v456 = vunpack.c.l.b16 %v417
        %v457 = vunpack.c.l.b16 %v418
        %v458 = vunpack.c.l.b16 %v419
        %v459 = vunpack.c.l.b16 %v420
        %v460 = vunpack.c.l.b16 %v421
        %v461 = vunpack.c.l.b16 %v422
        %v462 = vunpack.c.l.b16 %v423
        %v463 = vunpack.c.l.b16 %v424
        %v464 = vunpack.c.l.b16 %v425
        %v465 = vunpack.c.l.b16 %v426
        %v466 = vunpack.c.l.b16 %v427
        %v467 = vunpack.c.l.b16 %v428
        %v468 = vunpack.c.l.b16 %v429
        %v469 = vunpack.c.l.b16 %v430
        %v470 = vunpack.c.l.b16 %v431
        %v471 = vpack.c.b16 %v456, %v455
        %v472 = vpack.c.b16 %v458, %v457
        %v473 = vpack.c.b16 %v460, %v459
        %v474 = vpack.c.b16 %v462, %v461
        %v475 = vpack.c.b16 %v464, %v463
        %v476 = vpack.c.b16 %v466, %v465
        %v477 = vpack.c.b16 %v468, %v467
        %v478 = vpack.c.b16 %v470, %v469
        %487 = vmatprep.subr.bf16.mxu0 0
        %488 = vmatpush1.bf16.msra.mxu0 %v478
        %489 = vmatprep.subr.bf16.mxu0 0
        %490 = vmatpush1.bf16.msra.mxu0 %v477
        %491 = vmatprep.subr.bf16.mxu0 0
        %492 = vmatpush1.bf16.msra.mxu0 %v476
        %493 = vmatprep.subr.bf16.mxu0 0
        %494 = vmatpush1.bf16.msra.mxu0 %v475
        %495 = vmatprep.subr.bf16.mxu0 0
        %496 = vmatpush1.bf16.msra.mxu0 %v474
        %497 = vmatprep.subr.bf16.mxu0 0
        %498 = vmatpush1.bf16.msra.mxu0 %v473
        %499 = vmatprep.subr.bf16.mxu0 0
        %500 = vmatpush1.bf16.msra.mxu0 %v472
        %501 = vmatprep.subr.bf16.mxu0 0
        %502 = vmatpush1.bf16.msra.mxu0 %v471
        %503 = vmatprep.subr.bf16.mxu0 0
        %504 = vmatpush2.bf16.msra.mxu0 0
        %505 = vmatprep.subr.bf16.mxu0 0
        %506 = vmatpush2.bf16.msra.mxu0 0
        %507 = vmatprep.subr.bf16.mxu0 0
        %508 = vmatpush2.bf16.msra.mxu0 0
        %509 = vmatprep.subr.bf16.mxu0 0
        %510 = vmatpush2.bf16.msra.mxu0 0
        %511 = vmatprep.subr.bf16.mxu0 0
        %512 = vmatpush2.bf16.msra.mxu0 0
        %513 = vmatprep.subr.bf16.mxu0 0
        %514 = vmatpush2.bf16.msra.mxu0 0
        %515 = vmatprep.subr.bf16.mxu0 0
        %516 = vmatpush2.bf16.msra.mxu0 0
        %517 = vmatprep.subr.bf16.mxu0 0
        %518 = vmatpush2.bf16.msra.mxu0 0
        %519 = vmatprep.mubr.bf16.mxu0 0
        %520 = vmatmul.mubr.bf16.gmra.mxu0 %v415
        %v521 = vpop.f32.mrf.mxu0
        %v522 = vadd.f32 %v437, %v521
        %v523 = vpop.f32.mrf.mxu0
        %v524 = vpop.f32.mrf.mxu0
        %v525 = vadd.f32 %v437, %v524
        %v526 = vpop.f32.mrf.mxu0
        %527 = vdwg.mxu0
        %528 = vst [vmem:[%s289] sm:$0xff] %v522
        %529 = vst [vmem:[%s289 + $0x8] sm:$0xff] %v525
        %s530 = sand.u32 %s157, 1
        %s531 = scalar_lea.sflag [#allocation4], %s530
        %s532 = sand.u32 %s157, 1
        %s533 = smul.addr %s532, 16
        %s534 = scalar_lea.vmem [#allocation8], %s533
        // Predicated region
        $region53: #{tpu_custom_call.1} parent=39 // pred_check
          %p535 = pneg %p167
        $region54: #{tpu_custom_call.1} parent=39 // pred_check_branch
          %537 = sbr.rel (%p535) target = $region56
        $region55: #{tpu_custom_call.1} parent=39 // pred_region
          %s538 = smul.u32 2, %s28
          %s540 = ssub.s32 256, 256
          %541 = vsyncadd %s531, %s540
          %s542 = smul.addr %s27, 2
          %s543 = sadd.s32 %s538, %s542
          %s544 = smul.addr %s543, 128
          %s545 = scalar_lea.hbm %s5, %s544
          %s546 = sshll.u32 %s534, 4
          %s547 = int_to_ptr.vmem [resolvable:$true] %s546
          %552 = dma.vmem_to_hbm [thread:$0]  %s547, 256, %s545, %s531, 128, 128, 8
        $region56: #{tpu_custom_call.1} parent=39 // pred_fallthru
          _
      $region40: #{tpu_custom_call.1} parent=5 // pred_fallthru
        _
      %p553 = scmp.le.s32.totalorder 2, %s18
      // Predicated region
      $region57: #{tpu_custom_call.1} parent=5 // pred_check
        %p554 = pneg %p553
      $region58: #{tpu_custom_call.1} parent=5 // pred_check_branch
        %556 = sbr.rel (%p554) target = $region60
      $region59: #{tpu_custom_call.1} parent=5 // pred_region
        %s557 = ssub.s32 %s18, 2
        // Predicated region
        $region61: #{tpu_custom_call.1} parent=59 // pred_check
          %p558 = pneg %p173
        $region62: #{tpu_custom_call.1} parent=59 // pred_check_branch
          %560 = sbr.rel (%p558) target = $region64
        $region63: #{tpu_custom_call.1} parent=59 // pred_region
          %s561 = sand.u32 %s158, 1
          %s562 = scalar_lea.sflag [#allocation4], %s561
          %s563 = sand.u32 %s158, 1
          %s564 = smul.addr %s563, 16
          %s565 = scalar_lea.vmem [#allocation8], %s564
          %566 = dma.done %s562, 256
        $region64: #{tpu_custom_call.1} parent=59 // pred_fallthru
          _
      $region60: #{tpu_custom_call.1} parent=5 // pred_fallthru
        _
    $region6: #{tpu_custom_call.1} parent=1 // loop_footer
      %s22 = sadd.s32 1, %s18
    $region7: #{tpu_custom_call.1} parent=1 // loop_footer_branch
      %17 = sbr.rel target = $region3
    $region8: #{tpu_custom_call.1} parent=1 // loop_exit
      _
    %567 = vsyncpa [#allocation3], 1
    %s568 = scalar_lea.sflag [#allocation3], 1
    %569 = vsyncpa %s568, 1
    %570 = vsyncpa [#allocation6], 1
    %571 = vsyncpa [#allocation4], 1
    %s572 = scalar_lea.sflag [#allocation4], 1
    %573 = vsyncpa %s572, 1

</llo_original>
